<compile_context>
chip_gen: v5e
topology: v5e:2x2
jax: 0.10.0
libtpu: 0.0.40
codegen_flags: <defaults>
</compile_context>

<pallas_src>
import jax
import jax.numpy as jnp
from jax.experimental import pallas as pl
from jax.experimental.pallas import tpu as pltpu

_LANES = 128
_MAX_TILE_ROWS = 1024        # 1024*128*4B = 512 KiB/buffer -> ~2 MiB with in+out double-buffered
                             # (fits comfortably on v5e/v6e 128 MiB and v7x 64 MiB VMEM)
_FAST_PATH_ELEMS = 65536     # below this, skip pallas_call entirely (launch overhead dominates)


def _round_up(x, m):
    return ((x + m - 1) // m) * m


def _multitask_loss_kernel(coeff_ref, log_std_ref, losses_ref, out_ref):
    """out[t, tile] = coeff[t] * losses[t, tile] + log_std[t]

    coeff / log_std are (T,) f32 vectors in SMEM (one scalar read per grid step);
    losses / out are lane-dense (1, TILE_R, 128) VMEM tiles.  The only per-tile
    work is a scalar-broadcast multiply-add -> the kernel is strictly DMA bound.
    """
    t = pl.program_id(0)
    coeff = coeff_ref[t]          # scalar from SMEM
    log_std = log_std_ref[t]      # scalar from SMEM
    out_ref[...] = losses_ref[...] * coeff + log_std


def multitask_loss(losses_list, log_vars, are_regression, *,
                   force_pallas=None, tile_rows=None):
    """Matches MultiTaskLoss.forward.

    Args:
      losses_list: list of n_tasks arrays (any shape, flattened to (L,) each;
                   all tasks must have the same number of elements).
      log_vars: (n_tasks,) float32 parameter.
      are_regression: (n_tasks,) bool buffer.
      force_pallas: None = auto (fast jnp path for tiny inputs), True/False = force.
      tile_rows: override rows-per-tile (multiple of 8); default auto.

    Returns:
      list of n_tasks arrays of shape (L,), the scaled losses.
      (Callers who want zero post-kernel slicing can work with the stacked
       (T, L) result instead; the list return mirrors the PyTorch module.)
    """
    n_tasks = len(losses_list)
    losses = jnp.stack(
        [jnp.asarray(l, jnp.float32).reshape(-1) for l in losses_list], axis=0)
    T, L = losses.shape

    lv = jnp.asarray(log_vars, jnp.float32).reshape(T)
    ar = jnp.asarray(are_regression).astype(jnp.float32).reshape(T)

    # Per-task scalars (O(T), fused by XLA).  Algebraically identical to the
    # module's exp -> sqrt -> reciprocal -> log chain:
    #   coeff   = 1 / ((ar + 1) * exp(lv)) = exp(-lv) / (ar + 1)
    #   log_std = log(sqrt(exp(lv)))       = 0.5 * lv
    coeff = jnp.exp(-lv) / (ar + 1.0)
    log_std = 0.5 * lv

    use_pallas = force_pallas if force_pallas is not None else (T * L >= _FAST_PATH_ELEMS)
    if not use_pallas:
        out = coeff[:, None] * losses + log_std[:, None]
        return [out[i] for i in range(T)]

    # Lane/sublane-dense layout: (T, L) -> (T, rows, 128), rows padded so every
    # block is a full (TILE_R, 128) tile ((8,128) divisibility rule).
    rows = pl.cdiv(L, _LANES)
    if tile_rows is None:
        tile_rows = min(_MAX_TILE_ROWS, _round_up(rows, 8))
    tile_rows = max(8, _round_up(int(tile_rows), 8))
    rows_padded = _round_up(rows, tile_rows)
    l_padded = rows_padded * _LANES

    losses_p = jnp.pad(losses, ((0, 0), (0, l_padded - L))).reshape(T, rows_padded, _LANES)

    block = (1, tile_rows, _LANES)
    grid = (T, rows_padded // tile_rows)

    out3d = pl.pallas_call(
        _multitask_loss_kernel,
        out_shape=jax.ShapeDtypeStruct((T, rows_padded, _LANES), jnp.float32),
        grid=grid,
        in_specs=[
            pl.BlockSpec(memory_space=pltpu.SMEM),          # coeff   (T,) scalars
            pl.BlockSpec(memory_space=pltpu.SMEM),          # log_std (T,) scalars
            pl.BlockSpec(block, lambda t, j: (t, j, 0)),    # losses tile
        ],
        out_specs=pl.BlockSpec(block, lambda t, j: (t, j, 0)),
        compiler_params=pltpu.CompilerParams(
            dimension_semantics=("parallel", "parallel")),
    )(coeff, log_std, losses_p)

    out = out3d.reshape(T, l_padded)[:, :L]
    return [out[i] for i in range(T)]


def _reference(losses_list, lv, ar):
    """Plain-JAX transcription of the PyTorch forward (original formulation)."""
    lv = jnp.asarray(lv, jnp.float32)
    vars_ = jnp.exp(lv)
    stds = jnp.sqrt(vars_)
    coeffs = 1.0 / ((jnp.asarray(ar).astype(jnp.float32) + 1.0) * vars_)
    return [coeffs[i] * jnp.asarray(l, jnp.float32).reshape(-1) + jnp.log(stds[i])
            for i, l in enumerate(losses_list)]


if __name__ == "__main__":
    key = jax.random.PRNGKey(0)
    k1, k2, k3, k4 = jax.random.split(key, 4)

    # --- Case 1: the module's docstring example (2 tasks, loss shape (1,)).
    are_regression = jnp.array([False, False])
    log_vars = jnp.zeros((2,), dtype=jnp.float32)
    losses_small = [jax.random.uniform(k, (1,), dtype=jnp.float32) for k in (k1, k2)]

    out_fast = multitask_loss(losses_small, log_vars, are_regression)              # jnp fast path
    out_pallas = multitask_loss(losses_small, log_vars, are_regression,
                                force_pallas=True)                                 # Pallas path
    ref_small = _reference(losses_small, log_vars, are_regression)
    for o, r in zip(out_fast + out_pallas, ref_small + ref_small):
        o = jax.block_until_ready(o)
        assert jnp.allclose(o, r, atol=1e-6), (o, r)

    # --- Case 2: 3 tasks, L not a multiple of 128, multi-tile grid (exercises padding).
    are_reg2 = jnp.array([False, True, False])
    lv2 = 0.1 * jax.random.normal(k3, (3,), dtype=jnp.float32)
    L = 5000   # -> 40 rows of 128 lanes, padded to 48 with tile_rows=16 -> grid=(3, 3)
    losses_big = [jax.random.uniform(jax.random.fold_in(k4, i), (L,), dtype=jnp.float32)
                  for i in range(3)]
    out_big = multitask_loss(losses_big, lv2, are_reg2, force_pallas=True, tile_rows=16)
    ref_big = _reference(losses_big, lv2, are_reg2)
    for o, r in zip(out_big, ref_big):
        o = jax.block_until_ready(o)
        assert jnp.allclose(o, r, atol=1e-6), float(jnp.max(jnp.abs(o - r)))

    print("KERNEL_OK")
</pallas_src>

<mosaic_0001>
module attributes {stable_mosaic.version = 11 : i64} {
  func.func @_multitask_loss_kernel(%arg0: i32, %arg1: i32, %arg2: memref<2xf32, #tpu.memory_space<smem>>, %arg3: memref<2xf32, #tpu.memory_space<smem>>, %arg4: memref<1x8x128xf32, #tpu.memory_space<vmem>>, %arg5: memref<1x8x128xf32, #tpu.memory_space<vmem>>) attributes {dimension_semantics = [#tpu.dimension_semantics<parallel>, #tpu.dimension_semantics<parallel>], iteration_bounds = array<i64: 2, 1>, scalar_prefetch = 0 : i64, scratch_operands = 0 : i64, tpu.core_type = #tpu.core_type<tc>, window_params = [{transform_indices = @transform_0, window_bounds = array<i64: 2>}, {transform_indices = @transform_1, window_bounds = array<i64: 2>}, {transform_indices = @transform_2, window_bounds = array<i64: 1, 8, 128>}, {transform_indices = @transform_3, window_bounds = array<i64: 1, 8, 128>}]} {
    %0 = arith.index_cast %arg0 : i32 to index
    %1 = memref.load %arg2[%0] : memref<2xf32, #tpu.memory_space<smem>>
    %2 = arith.index_cast %arg0 : i32 to index
    %3 = memref.load %arg3[%2] : memref<2xf32, #tpu.memory_space<smem>>
    %c0 = arith.constant 0 : index
    %c0_0 = arith.constant 0 : index
    %c0_1 = arith.constant 0 : index
    %4 = vector.load %arg4[%c0, %c0_0, %c0_1] : memref<1x8x128xf32, #tpu.memory_space<vmem>>, vector<1x8x128xf32>
    %5 = vector.broadcast %1 : f32 to vector<1x8x128xf32>
    %6 = arith.mulf %4, %5 : vector<1x8x128xf32>
    %7 = vector.broadcast %3 : f32 to vector<1x8x128xf32>
    %8 = arith.addf %6, %7 : vector<1x8x128xf32>
    %c0_2 = arith.constant 0 : index
    %c0_3 = arith.constant 0 : index
    %c0_4 = arith.constant 0 : index
    %9 = vector.load %arg5[%c0_2, %c0_3, %c0_4] : memref<1x8x128xf32, #tpu.memory_space<vmem>>, vector<1x8x128xf32>
    tpu.vector_store %arg5[%c0_2, %c0_3, %c0_4], %8 {strides = array<i32>} : memref<1x8x128xf32, #tpu.memory_space<vmem>>, vector<1x8x128xf32>,
    return
  }
  func.func @transform_0(%arg0: i32, %arg1: i32) -> i32 {
    %c0_i32 = arith.constant 0 : i32
    %c0_i32_0 = arith.constant 0 : i32
    return %c0_i32 : i32
  }
  func.func @transform_1(%arg0: i32, %arg1: i32) -> i32 {
    %c0_i32 = arith.constant 0 : i32
    %c0_i32_0 = arith.constant 0 : i32
    return %c0_i32 : i32
  }
  func.func @transform_2(%arg0: i32, %arg1: i32) -> (i32, i32, i32) {
    %c0_i32 = arith.constant 0 : i32
    %c0_i32_0 = arith.constant 0 : i32
    return %arg0, %arg1, %c0_i32 : i32, i32, i32
  }
  func.func @transform_3(%arg0: i32, %arg1: i32) -> (i32, i32, i32) {
    %c0_i32 = arith.constant 0 : i32
    %c0_i32_0 = arith.constant 0 : i32
    return %arg0, %arg1, %c0_i32 : i32, i32, i32
  }
}

</mosaic_0001>

<llo_original>
// kernel: tpu_custom_call.1
$region0: #{tpu_custom_call.1}
  #allocation0 [shape = 'u32[]', space=smem, size = 0x4, offset = 0x4, fixed_abs, tag = 'smem constant byte address 0x4 - core index']
  #allocation1 [shape = 'u32[72,128]{1,0:T(1,128)}', space=vmem, size = 0x9000, scoped, tag = 'internal scratch']
  %s0 = inlined_call_operand.hbm [shape: f32[2], index: 0, kind: input, shape index: {}]
  %s1 = inlined_call_operand.hbm [shape: f32[2], index: 1, kind: input, shape index: {}]
  %s2 = inlined_call_operand.hbm [shape: f32[2,8,128], index: 2, kind: input, shape index: {}]
  %s3 = inlined_call_operand.hbm [shape: f32[2,8,128], index: 3, kind: output, shape index: {}]
  %s4 = sld [smem:[#allocation0]]
  $region57: #{tpu_custom_call.1} parent=0
    _
  %s6 = ssub.s32 1, %s4
  %s7 = scalar_select 0, %s6, %s4
  $region1: #{tpu_custom_call.1} parent=0
    #allocation2 [shape = 'u8[512]{0}', space=smem, size = 0x200, scoped, tag = 'input window, operand 0, single buffered']
    #allocation3 [shape = 's32[2]{0}', space=sflag, size = 0x8, scoped, tag = 'scoped memory for tpu_custom_call.1']
    #allocation4 [shape = 's32[2]{0}', space=sflag, size = 0x8, scoped, tag = 'scoped memory for tpu_custom_call.1']
    #allocation5 [shape = 's32[2]{0}', space=sflag, size = 0x8, scoped, tag = 'scoped memory for tpu_custom_call.1']
    #allocation6 [shape = 'u8[512]{0}', space=smem, size = 0x200, scoped, tag = 'input window, operand 1, single buffered']
    #allocation7 [shape = 's32[1]{0}', space=sflag, size = 0x4, scoped, tag = 'scoped memory for tpu_custom_call.1']
    #allocation8 [shape = 'u8[8192]{0}', space=vmem, size = 0x2000, scoped, tag = 'input window, operand 2']
    #allocation9 [shape = 'u8[8192]{0}', space=vmem, size = 0x2000, scoped, tag = 'output window, operand 0']
    %8 = vsyncpa [#allocation5], 0
    %9 = vsyncpa [#allocation7], 0
    %10 = vsyncpa [#allocation3], 0
    %s11 = scalar_lea.sflag [#allocation3], 1
    %12 = vsyncpa %s11, 0
    %13 = vsyncpa [#allocation4], 0
    %s14 = scalar_lea.sflag [#allocation4], 1
    %15 = vsyncpa %s14, 0
    loop: start=0, step=1, limit=4
    $region2: #{tpu_custom_call.1} parent=1 // loop_pre_header
      _
    $region3: #{tpu_custom_call.1} parent=1 // loop_header
      %s17 = sphi 0, %s21
      %p18 = scmp.ge.s32.totalorder %s17, 4
      %s24 = sphi 0, %s36
      %s25 = sphi 0, %s32
      %s26 = sphi 0, %s24
      %s27 = sphi 0, %s25
      %s28 = sphi 0, %s26
      %s29 = sphi 0, %s27
      %s37 = sphi 0, %s37
      %s39 = sphi 0, %s37
      %s40 = sphi 0, %s39
      %s54 = sphi 0, %s40
      %s58 = sphi 0, %s58
      %s60 = sphi 0, %s58
      %s61 = sphi 0, %s60
      %s75 = sphi 0, %s61
      %s83 = sphi 0, %s85
      %s86 = sphi 0, %s83
      %s87 = sphi 0, %s86
      %s103 = sphi 0, %s87
      %s111 = sphi 0, %s113
      %s114 = sphi 0, %s111
      %s115 = sphi 0, %s114
      %s131 = sphi 0, %s115
    $region4: #{tpu_custom_call.1} parent=1 // loop_header_branch
      %20 = sbr.rel (%p18) target = $region8
    $region5: #{tpu_custom_call.1} parent=1 // loop_body
      %s22 = ssub.s32 %s17, 1
      %s23 = ssub.s32 %s17, 2
      %s30 = sadd.s32 1, %s25
      %p31 = scmp.ge.s32.totalorder %s30, 1
      %s32 = scalar_select %p31, 0, %s30
      %s33 = sadd.s32 1, %s24
      %s34 = scalar_select %p31, %s33, %s24
      %p35 = scmp.ge.s32.totalorder %s34, 2
      %s36 = scalar_select %p35, 0, %s34
      %s38 = sadd.s32 %s37, 1
      %p41 = scmp.eq.s32.totalorder %s17, 1
      %p42 = scmp.ne.s32.totalorder %s37, %s39
      %p43 = scmp.eq.s32.totalorder %s17, 0
      %p44 = por %p42, %p43
      %p45 = scmp.ne.s32.totalorder %s37, %s39
      %p46 = scmp.eq.s32.totalorder %s22, 1
      %p47 = por %p45, %p46
      %p48 = scmp.ne.s32.totalorder %s39, %s40
      %p49 = scmp.eq.s32.totalorder %s22, 0
      %p50 = por %p48, %p49
      %p51 = scmp.ne.s32.totalorder %s39, %s40
      %p52 = scmp.eq.s32.totalorder %s23, 1
      %p53 = por %p51, %p52
      %p55 = scmp.ne.s32.totalorder %s40, %s54
      %p56 = scmp.eq.s32.totalorder %s23, 0
      %p57 = por %p55, %p56
      %s59 = sadd.s32 %s58, 1
      %p62 = scmp.eq.s32.totalorder %s17, 1
      %p63 = scmp.ne.s32.totalorder %s58, %s60
      %p64 = scmp.eq.s32.totalorder %s17, 0
      %p65 = por %p63, %p64
      %p66 = scmp.ne.s32.totalorder %s58, %s60
      %p67 = scmp.eq.s32.totalorder %s22, 1
      %p68 = por %p66, %p67
      %p69 = scmp.ne.s32.totalorder %s60, %s61
      %p70 = scmp.eq.s32.totalorder %s22, 0
      %p71 = por %p69, %p70
      %p72 = scmp.ne.s32.totalorder %s60, %s61
      %p73 = scmp.eq.s32.totalorder %s23, 1
      %p74 = por %p72, %p73
      %p76 = scmp.ne.s32.totalorder %s61, %s75
      %p77 = scmp.eq.s32.totalorder %s23, 0
      %p78 = por %p76, %p77
      %s79 = ssub.s32 %s24, %s36
      %s80 = ssub.s32 %s25, %s32
      %s81 = sor.u32 %s79, %s80
      %p82 = scmp.eq.s32.totalorder %s81, 0
      %s84 = sadd.s32 %s83, 1
      %s85 = scalar_select %p82, %s83, %s84
      %p88 = pneg %p82
      %p89 = scmp.eq.s32.totalorder %s17, 1
      %p90 = por %p88, %p89
      %p91 = scmp.ne.s32.totalorder %s83, %s86
      %p92 = scmp.eq.s32.totalorder %s17, 0
      %p93 = por %p91, %p92
      %p94 = scmp.ne.s32.totalorder %s83, %s86
      %p95 = scmp.eq.s32.totalorder %s22, 1
      %p96 = por %p94, %p95
      %p97 = scmp.ne.s32.totalorder %s86, %s87
      %p98 = scmp.eq.s32.totalorder %s22, 0
      %p99 = por %p97, %p98
      %p100 = scmp.ne.s32.totalorder %s86, %s87
      %p101 = scmp.eq.s32.totalorder %s23, 1
      %p102 = por %p100, %p101
      %p104 = scmp.ne.s32.totalorder %s87, %s103
      %p105 = scmp.eq.s32.totalorder %s23, 0
      %p106 = por %p104, %p105
      %s107 = ssub.s32 %s24, %s36
      %s108 = ssub.s32 %s25, %s32
      %s109 = sor.u32 %s107, %s108
      %p110 = scmp.eq.s32.totalorder %s109, 0
      %s112 = sadd.s32 %s111, 1
      %s113 = scalar_select %p110, %s111, %s112
      %p116 = pneg %p110
      %p117 = scmp.eq.s32.totalorder %s17, 1
      %p118 = por %p116, %p117
      %p119 = scmp.ne.s32.totalorder %s111, %s114
      %p120 = scmp.eq.s32.totalorder %s17, 0
      %p121 = por %p119, %p120
      %p122 = scmp.ne.s32.totalorder %s111, %s114
      %p123 = scmp.eq.s32.totalorder %s22, 1
      %p124 = por %p122, %p123
      %p125 = scmp.ne.s32.totalorder %s114, %s115
      %p126 = scmp.eq.s32.totalorder %s22, 0
      %p127 = por %p125, %p126
      %p128 = scmp.ne.s32.totalorder %s114, %s115
      %p129 = scmp.eq.s32.totalorder %s23, 1
      %p130 = por %p128, %p129
      %p132 = scmp.ne.s32.totalorder %s115, %s131
      %p133 = scmp.eq.s32.totalorder %s23, 0
      %p134 = por %p132, %p133
      %p135 = scmp.le.s32.totalorder 1, %s17
      %p136 = scmp.lt.s32.totalorder %s17, 3
      %p137 = pnand %p135, %p136
      %p138 = pneg %p137
      // Predicated region
      $region9: #{tpu_custom_call.1} parent=5 // pred_check
        _
      $region10: #{tpu_custom_call.1} parent=5 // pred_check_branch
        %140 = sbr.rel (%p137) target = $region12
      $region11: #{tpu_custom_call.1} parent=5 // pred_region
        %s141 = ssub.s32 %s17, 1
        // Predicated region
        $region13: #{tpu_custom_call.1} parent=11 // pred_check
          %p142 = pneg %p50
        $region14: #{tpu_custom_call.1} parent=11 // pred_check_branch
          %144 = sbr.rel (%p142) target = $region16
        $region15: #{tpu_custom_call.1} parent=11 // pred_region
          %146 = vsyncadd [#allocation5], 0
          %s148 = sshll.u32 %s0, 4
          %s149 = int_to_ptr.hbm [resolvable:$true] %s148
          %151 = dma.hbm_to_smem %s149, 16, [#allocation2], [#allocation5]
        $region16: #{tpu_custom_call.1} parent=11 // pred_fallthru
          _
        // Predicated region
        $region17: #{tpu_custom_call.1} parent=11 // pred_check
          %p152 = pneg %p71
        $region18: #{tpu_custom_call.1} parent=11 // pred_check_branch
          %154 = sbr.rel (%p152) target = $region20
        $region19: #{tpu_custom_call.1} parent=11 // pred_region
          %156 = vsyncadd [#allocation7], 0
          %s158 = sshll.u32 %s1, 4
          %s159 = int_to_ptr.hbm [resolvable:$true] %s158
          %161 = dma.hbm_to_smem %s159, 16, [#allocation6], [#allocation7]
        $region20: #{tpu_custom_call.1} parent=11 // pred_fallthru
          _
      $region12: #{tpu_custom_call.1} parent=5 // pred_fallthru
        _
      %p162 = scmp.lt.s32.totalorder %s17, 2
      // Predicated region
      $region21: #{tpu_custom_call.1} parent=5 // pred_check
        %p163 = pneg %p162
      $region22: #{tpu_custom_call.1} parent=5 // pred_check_branch
        %165 = sbr.rel (%p163) target = $region24
      $region23: #{tpu_custom_call.1} parent=5 // pred_region
        // Predicated region
        $region25: #{tpu_custom_call.1} parent=23 // pred_check
          %p166 = pneg %p93
        $region26: #{tpu_custom_call.1} parent=23 // pred_check_branch
          %168 = sbr.rel (%p166) target = $region28
        $region27: #{tpu_custom_call.1} parent=23 // pred_region
          %s169 = sand.u32 %s83, 1
          %s170 = scalar_lea.sflag [#allocation3], %s169
          %s171 = sand.u32 %s83, 1
          %s172 = smul.addr %s171, 8
          %s173 = scalar_lea.vmem [#allocation8], %s172
          %175 = vsyncadd %s170, 0
          %s176 = sadd.s32 %s25, %s24
          %s177 = smul.addr %s176, 8
          %s178 = scalar_lea.hbm %s2, %s177
          %s180 = sshll.u32 %s178, 4
          %s181 = int_to_ptr.hbm [resolvable:$true] %s180
          %s182 = sshll.u32 %s173, 4
          %s183 = int_to_ptr.vmem [resolvable:$true] %s182
          %185 = dma.hbm_to_vmem [thread:$0]  %s181, 128, %s183, %s170
        $region28: #{tpu_custom_call.1} parent=23 // pred_fallthru
          _
      $region24: #{tpu_custom_call.1} parent=5 // pred_fallthru
        _
      %p186 = scmp.le.s32.totalorder 1, %s17
      %p187 = scmp.lt.s32.totalorder %s17, 3
      %p188 = pnand %p186, %p187
      %p189 = pneg %p188
      // Predicated region
      $region29: #{tpu_custom_call.1} parent=5 // pred_check
        _
      $region30: #{tpu_custom_call.1} parent=5 // pred_check_branch
        %191 = sbr.rel (%p188) target = $region32
      $region31: #{tpu_custom_call.1} parent=5 // pred_region
        %s192 = ssub.s32 %s17, 1
        // Predicated region
        $region33: #{tpu_custom_call.1} parent=31 // pred_check
          %p193 = pneg %p50
        $region34: #{tpu_custom_call.1} parent=31 // pred_check_branch
          %195 = sbr.rel (%p193) target = $region36
        $region35: #{tpu_custom_call.1} parent=31 // pred_region
          %197 = dma.done [#allocation5], 16
        $region36: #{tpu_custom_call.1} parent=31 // pred_fallthru
          _
        // Predicated region
        $region37: #{tpu_custom_call.1} parent=31 // pred_check
          %p198 = pneg %p71
        $region38: #{tpu_custom_call.1} parent=31 // pred_check_branch
          %200 = sbr.rel (%p198) target = $region40
        $region39: #{tpu_custom_call.1} parent=31 // pred_region
          %202 = dma.done [#allocation7], 16
        $region40: #{tpu_custom_call.1} parent=31 // pred_fallthru
          _
        %s203 = sand.u32 %s86, 1
        %s204 = scalar_lea.sflag [#allocation3], %s203
        %s205 = sand.u32 %s86, 1
        %s206 = smul.addr %s205, 8
        %s207 = scalar_lea.vmem [#allocation8], %s206
        // Predicated region
        $region41: #{tpu_custom_call.1} parent=31 // pred_check
          %p208 = pneg %p99
        $region42: #{tpu_custom_call.1} parent=31 // pred_check_branch
          %210 = sbr.rel (%p208) target = $region44
        $region43: #{tpu_custom_call.1} parent=31 // pred_region
          %212 = dma.done %s204, 128
        $region44: #{tpu_custom_call.1} parent=31 // pred_fallthru
          _
        %213 = sfence
        %p214 = pneg %p50
        %p215 = pneg %p47
        %p216 = pneg %p71
        %p217 = pneg %p68
        %s218 = sand.u32 %s86, 1
        %s219 = scalar_lea.sflag [#allocation3], %s218
        %s220 = sand.u32 %s86, 1
        %s221 = smul.addr %s220, 8
        %s222 = scalar_lea.vmem [#allocation8], %s221
        %p223 = pneg %p99
        %p224 = pneg %p96
        %p225 = pneg %p127
        %p226 = pneg %p124
        %s227 = sand.u32 %s114, 1
        %s228 = scalar_lea.sflag [#allocation4], %s227
        %s229 = sand.u32 %s114, 1
        %s230 = smul.addr %s229, 8
        %s231 = scalar_lea.vmem [#allocation9], %s230
        %s232 = sld [smem:[#allocation2 + %s26]]
        %s233 = sld [smem:[#allocation6 + %s26]]
        %v234 = vld [vmem:[%s207] sm:$0xff]
        %v235 = vstv %s232
        %v236 = vmul.f32 %v234, %v235
        %v237 = vstv %s233
        %v238 = vadd.f32 %v236, %v237
        %239 = vst [vmem:[%s231] sm:$0xff] %v238
        %s240 = sand.u32 %s114, 1
        %s241 = scalar_lea.sflag [#allocation4], %s240
        %s242 = sand.u32 %s114, 1
        %s243 = smul.addr %s242, 8
        %s244 = scalar_lea.vmem [#allocation9], %s243
        // Predicated region
        $region45: #{tpu_custom_call.1} parent=31 // pred_check
          %p245 = pneg %p124
        $region46: #{tpu_custom_call.1} parent=31 // pred_check_branch
          %247 = sbr.rel (%p245) target = $region48
        $region47: #{tpu_custom_call.1} parent=31 // pred_region
          %249 = vsyncadd %s241, 0
          %s250 = sadd.s32 %s27, %s26
          %s251 = smul.addr %s250, 8
          %s252 = scalar_lea.hbm %s3, %s251
          %s254 = sshll.u32 %s244, 4
          %s255 = int_to_ptr.vmem [resolvable:$true] %s254
          %s256 = sshll.u32 %s252, 4
          %s257 = int_to_ptr.hbm [resolvable:$true] %s256
          %259 = dma.vmem_to_hbm [thread:$0]  %s255, 128, %s257, %s241
        $region48: #{tpu_custom_call.1} parent=31 // pred_fallthru
          _
      $region32: #{tpu_custom_call.1} parent=5 // pred_fallthru
        _
      %p260 = scmp.le.s32.totalorder 2, %s17
      // Predicated region
      $region49: #{tpu_custom_call.1} parent=5 // pred_check
        %p261 = pneg %p260
      $region50: #{tpu_custom_call.1} parent=5 // pred_check_branch
        %263 = sbr.rel (%p261) target = $region52
      $region51: #{tpu_custom_call.1} parent=5 // pred_region
        %s264 = ssub.s32 %s17, 2
        // Predicated region
        $region53: #{tpu_custom_call.1} parent=51 // pred_check
          %p265 = pneg %p130
        $region54: #{tpu_custom_call.1} parent=51 // pred_check_branch
          %267 = sbr.rel (%p265) target = $region56
        $region55: #{tpu_custom_call.1} parent=51 // pred_region
          %s268 = sand.u32 %s115, 1
          %s269 = scalar_lea.sflag [#allocation4], %s268
          %s270 = sand.u32 %s115, 1
          %s271 = smul.addr %s270, 8
          %s272 = scalar_lea.vmem [#allocation9], %s271
          %274 = dma.done %s269, 128
        $region56: #{tpu_custom_call.1} parent=51 // pred_fallthru
          _
      $region52: #{tpu_custom_call.1} parent=5 // pred_fallthru
        _
    $region6: #{tpu_custom_call.1} parent=1 // loop_footer
      %s21 = sadd.s32 1, %s17
    $region7: #{tpu_custom_call.1} parent=1 // loop_footer_branch
      %16 = sbr.rel target = $region3
    $region8: #{tpu_custom_call.1} parent=1 // loop_exit
      _
    %275 = vsyncpa [#allocation3], 1
    %s276 = scalar_lea.sflag [#allocation3], 1
    %277 = vsyncpa %s276, 1
    %278 = vsyncpa [#allocation4], 1
    %s279 = scalar_lea.sflag [#allocation4], 1
    %280 = vsyncpa %s279, 1
    %281 = vsyncpa [#allocation5], 1
    %s282 = scalar_lea.sflag [#allocation5], 1
    %283 = vsyncpa %s282, 1
    %284 = vsyncpa [#allocation7], 1

</llo_original>
